<compile_context>
chip_gen: v5e
topology: v5e:2x2
jax: 0.10.0
libtpu: 0.0.40
codegen_flags: <defaults>
</compile_context>

<pallas_src>
import jax
import jax.numpy as jnp
from jax.experimental import pallas as pl
from jax.experimental.pallas import tpu as pltpu

_LANE = 128
_SUBLANE = 8


def _round_up(a, m):
    return pl.cdiv(a, m) * m


def _locked_dropout_kernel(mask_ref, x_ref, o_ref):
    # mask_ref: (1, BH) pre-scaled mask (0 or 1/(1-p)); same block every grid
    # step -> resident in VMEM.  x_ref / o_ref: (t_tile, BH) lane-dense tiles.
    o_ref[...] = x_ref[...] * mask_ref[...]


def locked_dropout(x, key, p=0.5, donate_x=False):
    """Locked (variational) dropout on x of shape (T, B, H).

    One (1, B, H) Bernoulli(1-p)/(1-p) mask is applied at every timestep,
    matching the PyTorch LockedDropout forward. `p` must be a static float.
    """
    if not isinstance(p, (int, float)):
        raise TypeError("locked_dropout: p must be a static Python float")
    if p <= 0.0:
        return x
    assert p < 1.0, "dropout probability must be < 1"

    T, B, H = x.shape
    BH = B * H
    itemsize = jnp.dtype(x.dtype).itemsize

    # --- build the locked mask once: bernoulli(1-p) / (1-p), in input dtype
    # (PyTorch also divides in the input dtype). ---------------------------
    keep = jax.random.bernoulli(key, 1.0 - p, (1, BH))
    mask = keep.astype(x.dtype) * jnp.asarray(1.0 / (1.0 - p), dtype=x.dtype)

    # Lane-dense layout; the reshape is free, no pad / slice anywhere.
    x2 = x.reshape(T, BH)

    # --- generation-aware tile sizing -------------------------------------
    try:
        vmem_cap = int(pltpu.get_tpu_info().vmem_capacity_bytes)
    except Exception:
        vmem_cap = 128 * 1024 * 1024
    # ~8 MiB tiles when VMEM is tight (v7x: 64 MiB/TC), ~12 MiB otherwise.
    target_tile_bytes = (8 if vmem_cap <= 64 * 1024 * 1024 else 12) * 1024 * 1024

    # Sub-32-bit dtypes pack 2/4 rows per sublane; round rows accordingly.
    sublane_mult = max(_SUBLANE, 32 // max(itemsize, 1))
    row_bytes = max(BH * itemsize, 1)
    rows_for_target = max(
        sublane_mult,
        (target_tile_bytes // row_bytes) // sublane_mult * sublane_mult,
    )
    # Keep >= ~4 grid steps so both v7x TCs get work and double-buffering
    # stays effective on short-T inputs (harmless on single-TC chips).
    min_steps_rows = max(sublane_mult, _round_up(pl.cdiv(T, 4), sublane_mult))
    t_tile = max(sublane_mult, min(rows_for_target, min_steps_rows))

    grid = (pl.cdiv(T, t_tile),)

    # VMEM budget: double-buffered in + out tiles + resident mask + margin,
    # capped at ~75% of this generation's physical VMEM.
    tile_bytes = t_tile * BH * itemsize
    needed = 4 * tile_bytes + 4 * BH * itemsize + (4 << 20)
    vmem_limit = int(min(max(needed, 32 << 20), (vmem_cap * 3) // 4))

    bytes_accessed = 2 * T * BH * itemsize + BH * itemsize

    out2 = pl.pallas_call(
        _locked_dropout_kernel,
        out_shape=jax.ShapeDtypeStruct((T, BH), x.dtype),
        grid_spec=pltpu.PrefetchScalarGridSpec(
            num_scalar_prefetch=0,
            grid=grid,
            in_specs=[
                # mask: same block every step -> stays resident in VMEM
                pl.BlockSpec((1, BH), lambda t: (0, 0)),
                pl.BlockSpec((t_tile, BH), lambda t: (t, 0)),
            ],
            out_specs=pl.BlockSpec((t_tile, BH), lambda t: (t, 0)),
        ),
        compiler_params=pltpu.CompilerParams(
            dimension_semantics=("parallel",),   # v7x: shard T over both TCs
            vmem_limit_bytes=vmem_limit,
        ),
        cost_estimate=pl.CostEstimate(
            flops=T * BH,
            transcendentals=0,
            bytes_accessed=bytes_accessed,
        ),
        input_output_aliases=({1: 0} if donate_x else {}),
    )(mask, x2)

    return out2.reshape(T, B, H)


def _check(out, x, p):
    scaled = x / (1.0 - p)
    ok_vals = jnp.all(jnp.isclose(out, 0.0) | jnp.isclose(out, scaled, atol=1e-5))
    dropped = jnp.isclose(out, 0.0) & ~jnp.isclose(x, 0.0)
    locked = jnp.all(dropped == dropped[0:1])
    assert bool(ok_vals), "output values do not match x * mask / (1-p)"
    assert bool(locked), "dropout mask is not locked across the time axis"
    assert out.shape == x.shape and out.dtype == x.dtype


if __name__ == "__main__":
    p = 0.5
    key = jax.random.PRNGKey(0)
    k1, k2, k3, k4 = jax.random.split(key, 4)

    # Aligned case: (T, B, H) = (8, 4, 32) -> B*H = 128 (lane-aligned).
    x1 = jax.random.normal(k1, (8, 4, 32), dtype=jnp.float32)
    out1 = jax.block_until_ready(locked_dropout(x1, k2, p=p))
    _check(out1, x1, p)

    # Ragged T and non-128-multiple B*H: exercises the partial last T block
    # and the full-extent (unpadded) BH block path.
    x2 = jax.random.normal(k3, (13, 2, 48), dtype=jnp.float32)
    out2 = jax.block_until_ready(locked_dropout(x2, k4, p=p))
    _check(out2, x2, p)

    print("KERNEL_OK")
</pallas_src>

<mosaic_0001>
module attributes {stable_mosaic.version = 11 : i64} {
  func.func @_locked_dropout_kernel(%arg0: i32, %arg1: memref<1x128xf32, #tpu.memory_space<vmem>>, %arg2: memref<8x128xf32, #tpu.memory_space<vmem>>, %arg3: memref<8x128xf32, #tpu.memory_space<vmem>>) attributes {dimension_semantics = [#tpu.dimension_semantics<parallel>], iteration_bounds = array<i64: 1>, scalar_prefetch = 0 : i64, scratch_operands = 0 : i64, tpu.core_type = #tpu.core_type<tc>, window_params = [{pipeline_mode = #tpu.pipeline_mode<synchronous>, transform_indices = @transform_0, window_bounds = array<i64: 1, 128>}, {transform_indices = @transform_1, window_bounds = array<i64: 8, 128>}, {transform_indices = @transform_2, window_bounds = array<i64: 8, 128>}]} {
    %c0 = arith.constant 0 : index
    %c0_0 = arith.constant 0 : index
    %0 = vector.load %arg2[%c0, %c0_0] : memref<8x128xf32, #tpu.memory_space<vmem>>, vector<8x128xf32>
    %c0_1 = arith.constant 0 : index
    %c0_2 = arith.constant 0 : index
    %1 = vector.load %arg1[%c0_1, %c0_2] : memref<1x128xf32, #tpu.memory_space<vmem>>, vector<1x128xf32>
    %2 = vector.broadcast %1 : vector<1x128xf32> to vector<8x128xf32>
    %3 = arith.mulf %0, %2 : vector<8x128xf32>
    %c0_3 = arith.constant 0 : index
    %c0_4 = arith.constant 0 : index
    %4 = vector.load %arg3[%c0_3, %c0_4] : memref<8x128xf32, #tpu.memory_space<vmem>>, vector<8x128xf32>
    tpu.vector_store %arg3[%c0_3, %c0_4], %3 {strides = array<i32>} : memref<8x128xf32, #tpu.memory_space<vmem>>, vector<8x128xf32>,
    return
  }
  func.func @transform_0(%arg0: i32) -> (i32, i32) {
    %c0_i32 = arith.constant 0 : i32
    %c0_i32_0 = arith.constant 0 : i32
    %c0_i32_1 = arith.constant 0 : i32
    return %c0_i32, %c0_i32_0 : i32, i32
  }
  func.func @transform_1(%arg0: i32) -> (i32, i32) {
    %c0_i32 = arith.constant 0 : i32
    %c0_i32_0 = arith.constant 0 : i32
    return %arg0, %c0_i32 : i32, i32
  }
  func.func @transform_2(%arg0: i32) -> (i32, i32) {
    %c0_i32 = arith.constant 0 : i32
    %c0_i32_0 = arith.constant 0 : i32
    return %arg0, %c0_i32 : i32, i32
  }
}

</mosaic_0001>

<llo_original>
// kernel: tpu_custom_call.1
$region0: #{tpu_custom_call.1}
  #allocation0 [shape = 'u32[]', space=smem, size = 0x4, offset = 0x4, fixed_abs, tag = 'smem constant byte address 0x4 - core index']
  #allocation1 [shape = 'u32[72,128]{1,0:T(1,128)}', space=vmem, size = 0x9000, scoped, tag = 'internal scratch']
  %s0 = inlined_call_operand.hbm [shape: f32[1,128], index: 0, kind: input, shape index: {}]
  %s1 = inlined_call_operand.hbm [shape: f32[8,128], index: 1, kind: input, shape index: {}]
  %s2 = inlined_call_operand.hbm [shape: f32[8,128], index: 2, kind: output, shape index: {}]
  %s3 = sld [smem:[#allocation0]]
  $region26: #{tpu_custom_call.1} parent=0
    _
  %s5 = ssub.s32 1, %s3
  %s6 = scalar_select 0, %s5, %s3
  $region1: #{tpu_custom_call.1} parent=0
    #allocation2 [shape = 'u8[512]{0}', space=vmem, size = 0x400, scoped, tag = 'input window, operand 0, single buffered']
    #allocation3 [shape = 's32[1]{0}', space=sflag, size = 0x4, scoped, tag = 'scoped memory for tpu_custom_call.1']
    #allocation4 [shape = 's32[1]{0}', space=sflag, size = 0x4, scoped, tag = 'scoped memory for tpu_custom_call.1']
    #allocation5 [shape = 'u8[4096]{0}', space=vmem, size = 0x1000, scoped, tag = 'input window, operand 1, single buffered']
    #allocation6 [shape = 's32[1]{0}', space=sflag, size = 0x4, scoped, tag = 'scoped memory for tpu_custom_call.1']
    #allocation7 [shape = 'u8[4096]{0}', space=vmem, size = 0x1000, scoped, tag = 'output window, operand 0, single buffered']
    %7 = vsyncpa [#allocation3], 0
    %8 = vsyncpa [#allocation6], 0
    %9 = vsyncpa [#allocation4], 0
    // Predicated region
    $region2: #{tpu_custom_call.1} parent=1 // pred_check
      _
    $region3: #{tpu_custom_call.1} parent=1 // pred_check_branch
      %11 = sbr.rel (0) target = $region5
    $region4: #{tpu_custom_call.1} parent=1 // pred_region
      %13 = vsyncadd [#allocation3], 0
      %s15 = sshll.u32 %s0, 4
      %s16 = int_to_ptr.hbm [resolvable:$true] %s15
      %s17 = sshll.u32 [#allocation2], 4
      %s18 = int_to_ptr.vmem [resolvable:$true] %s17
      %20 = dma.hbm_to_vmem [thread:$0]  %s16, 16, %s18, [#allocation3]
    $region5: #{tpu_custom_call.1} parent=1 // pred_fallthru
      _
    // Predicated region
    $region6: #{tpu_custom_call.1} parent=1 // pred_check
      _
    $region7: #{tpu_custom_call.1} parent=1 // pred_check_branch
      %22 = sbr.rel (0) target = $region9
    $region8: #{tpu_custom_call.1} parent=1 // pred_region
      %24 = vsyncadd [#allocation6], 0
      %s26 = sshll.u32 %s1, 4
      %s27 = int_to_ptr.hbm [resolvable:$true] %s26
      %s28 = sshll.u32 [#allocation5], 4
      %s29 = int_to_ptr.vmem [resolvable:$true] %s28
      %31 = dma.hbm_to_vmem [thread:$0]  %s27, 128, %s29, [#allocation6]
    $region9: #{tpu_custom_call.1} parent=1 // pred_fallthru
      _
    // Predicated region
    $region10: #{tpu_custom_call.1} parent=1 // pred_check
      _
    $region11: #{tpu_custom_call.1} parent=1 // pred_check_branch
      %33 = sbr.rel (0) target = $region13
    $region12: #{tpu_custom_call.1} parent=1 // pred_region
      %35 = dma.done [#allocation3], 16
    $region13: #{tpu_custom_call.1} parent=1 // pred_fallthru
      _
    // Predicated region
    $region14: #{tpu_custom_call.1} parent=1 // pred_check
      _
    $region15: #{tpu_custom_call.1} parent=1 // pred_check_branch
      %37 = sbr.rel (0) target = $region17
    $region16: #{tpu_custom_call.1} parent=1 // pred_region
      %39 = dma.done [#allocation6], 128
    $region17: #{tpu_custom_call.1} parent=1 // pred_fallthru
      _
    %v40 = vld [vmem:[#allocation5] sm:$0xff]
    %v41 = vld [vmem:[#allocation2] sm:$0x1]
    %v43 = vperm.slane %v41, 0
    %v45 = vmul.f32 %v40, %v43
    %46 = vst [vmem:[#allocation7] sm:$0xff] %v45
    // Predicated region
    $region18: #{tpu_custom_call.1} parent=1 // pred_check
      _
    $region19: #{tpu_custom_call.1} parent=1 // pred_check_branch
      %48 = sbr.rel (0) target = $region21
    $region20: #{tpu_custom_call.1} parent=1 // pred_region
      %50 = vsyncadd [#allocation4], 0
      %s52 = sshll.u32 [#allocation7], 4
      %s53 = int_to_ptr.vmem [resolvable:$true] %s52
      %s54 = sshll.u32 %s2, 4
      %s55 = int_to_ptr.hbm [resolvable:$true] %s54
      %57 = dma.vmem_to_hbm [thread:$0]  %s53, 128, %s55, [#allocation4]
    $region21: #{tpu_custom_call.1} parent=1 // pred_fallthru
      _
    // Predicated region
    $region22: #{tpu_custom_call.1} parent=1 // pred_check
      _
    $region23: #{tpu_custom_call.1} parent=1 // pred_check_branch
      %59 = sbr.rel (0) target = $region25
    $region24: #{tpu_custom_call.1} parent=1 // pred_region
      %61 = dma.done [#allocation4], 128
    $region25: #{tpu_custom_call.1} parent=1 // pred_fallthru
      _
    %62 = vsyncpa [#allocation3], 1
    %63 = vsyncpa [#allocation6], 1
    %64 = vsyncpa [#allocation4], 1

</llo_original>
